<compile_context>
chip_gen: v6e
topology: v6e:2x2x1
jax: 0.10.0
libtpu: 0.0.40
codegen_flags: <defaults>
</compile_context>

<pallas_src>
import functools

import jax
import jax.numpy as jnp
from jax.experimental import pallas as pl
from jax.experimental.pallas import tpu as pltpu


def ffn_kernel(x_ref, w13_ref, w2t_ref, o_ref, acc_ref, *, tn):
    """One (tm x dim) row tile against one tn-wide slice of hidden.

    x_ref  : (tm, dim)        -- resident across the hidden ("arbitrary") axis
    w13_ref: (dim, 2*tn)      -- [w1^T block j | w3^T block j]
    w2t_ref: (tn, dim)        -- w2^T block j
    o_ref  : (tm, dim)
    acc_ref: (tm, dim) f32 VMEM scratch (accumulates the down projection).
    """
    j = pl.program_id(1)

    @pl.when(j == 0)
    def _():
        acc_ref[...] = jnp.zeros_like(acc_ref)

    x = x_ref[...]
    # Single fused up-projection MXU push: (tm, dim) @ (dim, 2*tn) -> (tm, 2*tn), f32 acc.
    h = jnp.dot(x, w13_ref[...], preferred_element_type=jnp.float32)
    h1 = h[:, :tn]          # lane-aligned static slices (tn is a multiple of 128
    h3 = h[:, tn:]          # or equals hidden) -> essentially free.
    # SwiGLU gate in f32 (sigmoid lowers to the EUP slot, overlaps with MXU work).
    gated = (h1 * jax.nn.sigmoid(h1)) * h3
    # Partial down projection, accumulated over the hidden grid axis.
    acc_ref[...] += jnp.dot(gated.astype(w2t_ref.dtype), w2t_ref[...],
                            preferred_element_type=jnp.float32)

    @pl.when(j == pl.num_programs(1) - 1)
    def _():
        # dropout p = 0.0 -> identity
        o_ref[...] = acc_ref[...].astype(o_ref.dtype)


def _default_tn(hidden):
    # Prefer ~512-wide hidden blocks (safe for v7x's 64 MiB VMEM at dim=4096 bf16),
    # falling back to other 128-multiples that divide `hidden`.
    for cand in (512, 1024, 256, 128, 2048):
        if cand <= hidden and hidden % cand == 0:
            return cand
    return hidden  # tiny hidden (toy shapes): take the whole axis


def _default_tm(M):
    if M >= 256:
        return 256
    return max(8, ((M + 7) // 8) * 8)


def prepare_ffn_weights(w1, w2, w3, *, tn):
    """One-time weight repack — call at parameter-load time, NOT per forward.

    w1, w3: (hidden, dim) and w2: (dim, hidden)  (PyTorch nn.Linear layout).
    Returns:
      w13t: (dim, 2*hidden), hidden-block-interleaved so columns
            [j*2*tn : (j+1)*2*tn] hold [w1^T block j | w3^T block j].
      w2t : (hidden, dim)
    """
    hidden, dim = w1.shape
    assert w3.shape == (hidden, dim) and w2.shape == (dim, hidden)
    assert hidden % tn == 0, "tn must divide hidden"
    nb = hidden // tn
    w1t = w1.T.reshape(dim, nb, tn)
    w3t = w3.T.reshape(dim, nb, tn)
    w13t = jnp.concatenate([w1t, w3t], axis=-1).reshape(dim, 2 * hidden)
    return w13t, w2.T


def feed_forward(x, w13t, w2t, *, tn, tm=None, vmem_limit_bytes=None):
    """x: [batch, seq, dim]; w13t: [dim, 2*hidden] (from prepare_ffn_weights);
    w2t: [hidden, dim]."""
    b, s, dim = x.shape
    hidden = w2t.shape[0]
    assert w13t.shape == (dim, 2 * hidden)
    assert hidden % tn == 0

    M = b * s
    if tm is None:
        tm = _default_tm(M)
    M_pad = pl.cdiv(M, tm) * tm

    x2d = x.reshape(M, dim)
    if M_pad != M:
        x2d = jnp.pad(x2d, ((0, M_pad - M), (0, 0)))

    grid = (M_pad // tm, hidden // tn)

    # VMEM budget: double-buffered weight blocks + x tile + output tile + f32 accumulator.
    w_bytes = max(w13t.dtype.itemsize, w2t.dtype.itemsize)
    blk_bytes = (2 * (dim * 2 * tn * w_bytes + tn * dim * w_bytes)
                 + 2 * tm * dim * x2d.dtype.itemsize
                 + 2 * tm * dim * x.dtype.itemsize
                 + tm * dim * 4)
    if vmem_limit_bytes is None:
        vmem_limit_bytes = min(100 * 1024 * 1024,
                               max(32 * 1024 * 1024, int(blk_bytes * 1.25) + (4 << 20)))

    cost = pl.CostEstimate(
        flops=6 * M * dim * hidden,
        transcendentals=M * hidden,
        bytes_accessed=(x2d.size * x2d.dtype.itemsize
                        + w13t.size * w13t.dtype.itemsize
                        + w2t.size * w2t.dtype.itemsize
                        + M * dim * x.dtype.itemsize),
    )

    out2d = pl.pallas_call(
        functools.partial(ffn_kernel, tn=tn),
        out_shape=jax.ShapeDtypeStruct((M_pad, dim), x.dtype),
        grid_spec=pltpu.PrefetchScalarGridSpec(
            num_scalar_prefetch=0,
            grid=grid,
            in_specs=[
                pl.BlockSpec((tm, dim), lambda i, j: (i, 0)),        # x row tile (resident over j)
                pl.BlockSpec((dim, 2 * tn), lambda i, j: (0, j)),    # fused [w1|w3]^T block
                pl.BlockSpec((tn, dim), lambda i, j: (j, 0)),        # w2^T block
            ],
            out_specs=pl.BlockSpec((tm, dim), lambda i, j: (i, 0)),
            scratch_shapes=[pltpu.VMEM((tm, dim), jnp.float32)],
        ),
        compiler_params=pltpu.CompilerParams(
            dimension_semantics=("parallel", "arbitrary"),
            vmem_limit_bytes=vmem_limit_bytes,
        ),
        cost_estimate=cost,
    )(x2d, w13t, w2t)

    return out2d[:M].reshape(b, s, dim)


def feed_forward_ref(x, w1, w2, w3):
    h1 = jnp.einsum("bsd,hd->bsh", x, w1)
    h3 = jnp.einsum("bsd,hd->bsh", x, w3)
    g = (h1 * jax.nn.sigmoid(h1)) * h3
    return jnp.einsum("bsh,dh->bsd", g, w2)


if __name__ == "__main__":
    # Small, shape-consistent config (hidden_dim = 4*dim as in ModelConfig).
    # seq=72 makes M=144 not a multiple of tm=128, exercising the padding path
    # and a 2x4 grid (2 row tiles x 4 hidden blocks).
    batch, seq, dim = 2, 72, 128
    hidden = 4 * dim  # 512
    tn = 128
    tm = 128

    key = jax.random.PRNGKey(0)
    kx, k1, k2, k3 = jax.random.split(key, 4)

    x = jax.random.normal(kx, (batch, seq, dim), dtype=jnp.float32)
    # nn.Linear(dim, hidden, bias=False) -> weight (hidden, dim); w2: (dim, hidden)
    bound1 = 1.0 / (dim ** 0.5)
    bound2 = 1.0 / (hidden ** 0.5)
    w1 = jax.random.uniform(k1, (hidden, dim), jnp.float32, -bound1, bound1)
    w3 = jax.random.uniform(k3, (hidden, dim), jnp.float32, -bound1, bound1)
    w2 = jax.random.uniform(k2, (dim, hidden), jnp.float32, -bound2, bound2)

    # One-time repack (load time), then run the kernel.
    w13t, w2t = prepare_ffn_weights(w1, w2, w3, tn=tn)
    out = feed_forward(x, w13t, w2t, tn=tn, tm=tm)
    out = jax.block_until_ready(out)

    ref = feed_forward_ref(x, w1, w2, w3)
    assert out.shape == (batch, seq, dim)
    assert jnp.allclose(out, ref, atol=1e-4, rtol=1e-4), "mismatch vs reference"

    print("KERNEL_OK")
</pallas_src>

<mosaic_0001>
module attributes {stable_mosaic.version = 11 : i64} {
  func.func @ffn_kernel(%arg0: i32, %arg1: i32, %arg2: memref<128x128xf32, #tpu.memory_space<vmem>>, %arg3: memref<128x256xf32, #tpu.memory_space<vmem>>, %arg4: memref<128x128xf32, #tpu.memory_space<vmem>>, %arg5: memref<128x128xf32, #tpu.memory_space<vmem>>, %arg6: memref<128x128xf32, #tpu.memory_space<vmem>>) attributes {dimension_semantics = [#tpu.dimension_semantics<parallel>, #tpu.dimension_semantics<arbitrary>], iteration_bounds = array<i64: 2, 4>, scalar_prefetch = 0 : i64, scratch_operands = 1 : i64, tpu.core_type = #tpu.core_type<tc>, window_params = [{transform_indices = @transform_0, window_bounds = array<i64: 128, 128>}, {transform_indices = @transform_1, window_bounds = array<i64: 128, 256>}, {transform_indices = @transform_2, window_bounds = array<i64: 128, 128>}, {transform_indices = @transform_3, window_bounds = array<i64: 128, 128>}]} {
    %c0_i32 = arith.constant 0 : i32
    %0 = arith.cmpi eq, %arg1, %c0_i32 : i32
    %1 = arith.extui %0 : i1 to i32
    %c0_i32_0 = arith.constant 0 : i32
    %2 = arith.cmpi ne, %1, %c0_i32_0 : i32
    scf.if %2 {
      %cst_13 = arith.constant 0.000000e+00 : f32
      %23 = vector.broadcast %cst_13 : f32 to vector<128x128xf32>
      %c0_14 = arith.constant 0 : index
      %c0_15 = arith.constant 0 : index
      %24 = vector.load %arg6[%c0_14, %c0_15] : memref<128x128xf32, #tpu.memory_space<vmem>>, vector<128x128xf32>
      tpu.vector_store %arg6[%c0_14, %c0_15], %23 {strides = array<i32>} : memref<128x128xf32, #tpu.memory_space<vmem>>, vector<128x128xf32>,
    } else {
    }
    %c0 = arith.constant 0 : index
    %c0_1 = arith.constant 0 : index
    %3 = vector.load %arg2[%c0, %c0_1] : memref<128x128xf32, #tpu.memory_space<vmem>>, vector<128x128xf32>
    %c0_2 = arith.constant 0 : index
    %c0_3 = arith.constant 0 : index
    %4 = vector.load %arg3[%c0_2, %c0_3] : memref<128x256xf32, #tpu.memory_space<vmem>>, vector<128x256xf32>
    %cst = arith.constant dense<0.000000e+00> : vector<128x256xf32>
    %5 = tpu.matmul %3, %4, %cst {dimension_numbers = #tpu.dot_dimension_numbers<[1], [0], [0], [1], [0, 0, 1, 1], [], []>} : vector<128x128xf32>, vector<128x256xf32>, vector<128x256xf32> -> vector<128x256xf32>
    %6 = vector.extract_strided_slice %5 {offsets = [0, 0], sizes = [128, 128], strides = [1, 1]} : vector<128x256xf32> to vector<128x128xf32>
    %7 = vector.extract_strided_slice %5 {offsets = [0, 128], sizes = [128, 128], strides = [1, 1]} : vector<128x256xf32> to vector<128x128xf32>
    %8 = arith.negf %6 : vector<128x128xf32>
    %9 = math.exp %8 : vector<128x128xf32>
    %cst_4 = arith.constant 1.000000e+00 : f32
    %10 = vector.broadcast %cst_4 : f32 to vector<128x128xf32>
    %11 = arith.addf %10, %9 : vector<128x128xf32>
    %12 = arith.divf %10, %11 : vector<128x128xf32>
    %13 = arith.mulf %6, %12 : vector<128x128xf32>
    %14 = arith.mulf %13, %7 : vector<128x128xf32>
    %c0_5 = arith.constant 0 : index
    %c0_6 = arith.constant 0 : index
    %15 = vector.load %arg6[%c0_5, %c0_6] : memref<128x128xf32, #tpu.memory_space<vmem>>, vector<128x128xf32>
    %c0_7 = arith.constant 0 : index
    %c0_8 = arith.constant 0 : index
    %16 = vector.load %arg4[%c0_7, %c0_8] : memref<128x128xf32, #tpu.memory_space<vmem>>, vector<128x128xf32>
    %cst_9 = arith.constant dense<0.000000e+00> : vector<128x128xf32>
    %17 = tpu.matmul %14, %16, %cst_9 {dimension_numbers = #tpu.dot_dimension_numbers<[1], [0], [0], [1], [0, 0, 1, 1], [], []>} : vector<128x128xf32>, vector<128x128xf32>, vector<128x128xf32> -> vector<128x128xf32>
    %18 = arith.addf %15, %17 : vector<128x128xf32>
    %c0_10 = arith.constant 0 : index
    %c0_11 = arith.constant 0 : index
    %19 = vector.load %arg6[%c0_10, %c0_11] : memref<128x128xf32, #tpu.memory_space<vmem>>, vector<128x128xf32>
    tpu.vector_store %arg6[%c0_10, %c0_11], %18 {strides = array<i32>} : memref<128x128xf32, #tpu.memory_space<vmem>>, vector<128x128xf32>,
    %c3_i32 = arith.constant 3 : i32
    %20 = arith.cmpi eq, %arg1, %c3_i32 : i32
    %21 = arith.extui %20 : i1 to i32
    %c0_i32_12 = arith.constant 0 : i32
    %22 = arith.cmpi ne, %21, %c0_i32_12 : i32
    scf.if %22 {
      %c0_13 = arith.constant 0 : index
      %c0_14 = arith.constant 0 : index
      %23 = vector.load %arg6[%c0_13, %c0_14] : memref<128x128xf32, #tpu.memory_space<vmem>>, vector<128x128xf32>
      %c0_15 = arith.constant 0 : index
      %c0_16 = arith.constant 0 : index
      %24 = vector.load %arg5[%c0_15, %c0_16] : memref<128x128xf32, #tpu.memory_space<vmem>>, vector<128x128xf32>
      tpu.vector_store %arg5[%c0_15, %c0_16], %23 {strides = array<i32>} : memref<128x128xf32, #tpu.memory_space<vmem>>, vector<128x128xf32>,
    } else {
    }
    return
  }
  func.func @transform_0(%arg0: i32, %arg1: i32) -> (i32, i32) {
    %c0_i32 = arith.constant 0 : i32
    %c0_i32_0 = arith.constant 0 : i32
    return %arg0, %c0_i32 : i32, i32
  }
  func.func @transform_1(%arg0: i32, %arg1: i32) -> (i32, i32) {
    %c0_i32 = arith.constant 0 : i32
    %c0_i32_0 = arith.constant 0 : i32
    return %c0_i32, %arg1 : i32, i32
  }
  func.func @transform_2(%arg0: i32, %arg1: i32) -> (i32, i32) {
    %c0_i32 = arith.constant 0 : i32
    %c0_i32_0 = arith.constant 0 : i32
    return %arg1, %c0_i32 : i32, i32
  }
  func.func @transform_3(%arg0: i32, %arg1: i32) -> (i32, i32) {
    %c0_i32 = arith.constant 0 : i32
    %c0_i32_0 = arith.constant 0 : i32
    return %arg0, %c0_i32 : i32, i32
  }
}

</mosaic_0001>

<llo_original>
// kernel: tpu_custom_call.1
$region0: #{tpu_custom_call.1}
  #allocation0 [shape = 'u32[]', space=smem, size = 0x4, offset = 0x4, fixed_abs, tag = 'smem constant byte address 0x4 - core index']
  #allocation1 [shape = 'u32[144,128]{1,0:T(1,128)}', space=vmem, size = 0x12000, scoped, tag = 'internal scratch']
  #allocation2 [shape = 'f32[128,128]{1,0:T(8,128)}', space=vmem, size = 0x10000, scoped, tag = 'scratch operand']
  %s0 = inlined_call_operand.hbm [shape: f32[256,128], index: 0, kind: input, shape index: {}]
  %s1 = inlined_call_operand.hbm [shape: f32[128,1024], index: 1, kind: input, shape index: {}]
  %s2 = inlined_call_operand.hbm [shape: f32[512,128], index: 2, kind: input, shape index: {}]
  %s3 = inlined_call_operand.hbm [shape: f32[256,128], index: 3, kind: output, shape index: {}]
  %s4 = sld [smem:[#allocation0]]
  $region65: #{tpu_custom_call.1} parent=0
    _
  %s6 = ssub.s32 1, %s4
  %s7 = scalar_select 0, %s6, %s4
  $region1: #{tpu_custom_call.1} parent=0
    #allocation3 [shape = 'u8[131072]{0}', space=vmem, size = 0x20000, scoped, tag = 'input window, operand 0']
    #allocation4 [shape = 's32[2]{0}', space=sflag, size = 0x8, scoped, tag = 'scoped memory for tpu_custom_call.1']
    #allocation5 [shape = 's32[2]{0}', space=sflag, size = 0x8, scoped, tag = 'scoped memory for tpu_custom_call.1']
    #allocation6 [shape = 'u8[262144]{0}', space=vmem, size = 0x40000, scoped, tag = 'input window, operand 1']
    #allocation7 [shape = 's32[2]{0}', space=sflag, size = 0x8, scoped, tag = 'scoped memory for tpu_custom_call.1']
    #allocation8 [shape = 'u8[131072]{0}', space=vmem, size = 0x20000, scoped, tag = 'input window, operand 2']
    #allocation9 [shape = 'u8[131072]{0}', space=vmem, size = 0x20000, scoped, tag = 'output window, operand 0']
    %8 = vsyncpa [#allocation4], 0
    %s9 = scalar_lea.sflag [#allocation4], 1
    %10 = vsyncpa %s9, 0
    %11 = vsyncpa [#allocation7], 0
    %s12 = scalar_lea.sflag [#allocation7], 1
    %13 = vsyncpa %s12, 0
    %14 = vsyncpa [#allocation5], 0
    %s15 = scalar_lea.sflag [#allocation5], 1
    %16 = vsyncpa %s15, 0
    loop: start=0, step=1, limit=10
    $region2: #{tpu_custom_call.1} parent=1 // loop_pre_header
      _
    $region3: #{tpu_custom_call.1} parent=1 // loop_header
      %s18 = sphi 0, %s22
      %p19 = scmp.ge.s32.totalorder %s18, 10
      %s25 = sphi 0, %s37
      %s26 = sphi 0, %s33
      %s27 = sphi 0, %s25
      %s28 = sphi 0, %s26
      %s29 = sphi 0, %s27
      %s30 = sphi 0, %s28
      %s40 = sphi 0, %s42
      %s43 = sphi 0, %s40
      %s44 = sphi 0, %s43
      %s60 = sphi 0, %s44
      %s66 = sphi 0, %s68
      %s69 = sphi 0, %s66
      %s70 = sphi 0, %s69
      %s86 = sphi 0, %s70
      %s92 = sphi 0, %s94
      %s95 = sphi 0, %s92
      %s96 = sphi 0, %s95
      %s112 = sphi 0, %s96
      %s118 = sphi 0, %s120
      %s121 = sphi 0, %s118
      %s122 = sphi 0, %s121
      %s138 = sphi 0, %s122
    $region4: #{tpu_custom_call.1} parent=1 // loop_header_branch
      %21 = sbr.rel (%p19) target = $region8
    $region5: #{tpu_custom_call.1} parent=1 // loop_body
      %s23 = ssub.s32 %s18, 1
      %s24 = ssub.s32 %s18, 2
      %s31 = sadd.s32 1, %s26
      %p32 = scmp.ge.s32.totalorder %s31, 4
      %s33 = scalar_select %p32, 0, %s31
      %s34 = sadd.s32 1, %s25
      %s35 = scalar_select %p32, %s34, %s25
      %p36 = scmp.ge.s32.totalorder %s35, 2
      %s37 = scalar_select %p36, 0, %s35
      %s38 = ssub.s32 %s25, %s37
      %p39 = scmp.eq.s32.totalorder %s38, 0
      %s41 = sadd.s32 %s40, 1
      %s42 = scalar_select %p39, %s40, %s41
      %p45 = pneg %p39
      %p46 = scmp.eq.s32.totalorder %s18, 7
      %p47 = por %p45, %p46
      %p48 = scmp.ne.s32.totalorder %s40, %s43
      %p49 = scmp.eq.s32.totalorder %s18, 0
      %p50 = por %p48, %p49
      %p51 = scmp.ne.s32.totalorder %s40, %s43
      %p52 = scmp.eq.s32.totalorder %s23, 7
      %p53 = por %p51, %p52
      %p54 = scmp.ne.s32.totalorder %s43, %s44
      %p55 = scmp.eq.s32.totalorder %s23, 0
      %p56 = por %p54, %p55
      %p57 = scmp.ne.s32.totalorder %s43, %s44
      %p58 = scmp.eq.s32.totalorder %s24, 7
      %p59 = por %p57, %p58
      %p61 = scmp.ne.s32.totalorder %s44, %s60
      %p62 = scmp.eq.s32.totalorder %s24, 0
      %p63 = por %p61, %p62
      %s64 = ssub.s32 %s26, %s33
      %p65 = scmp.eq.s32.totalorder %s64, 0
      %s67 = sadd.s32 %s66, 1
      %s68 = scalar_select %p65, %s66, %s67
      %p71 = pneg %p65
      %p72 = scmp.eq.s32.totalorder %s18, 7
      %p73 = por %p71, %p72
      %p74 = scmp.ne.s32.totalorder %s66, %s69
      %p75 = scmp.eq.s32.totalorder %s18, 0
      %p76 = por %p74, %p75
      %p77 = scmp.ne.s32.totalorder %s66, %s69
      %p78 = scmp.eq.s32.totalorder %s23, 7
      %p79 = por %p77, %p78
      %p80 = scmp.ne.s32.totalorder %s69, %s70
      %p81 = scmp.eq.s32.totalorder %s23, 0
      %p82 = por %p80, %p81
      %p83 = scmp.ne.s32.totalorder %s69, %s70
      %p84 = scmp.eq.s32.totalorder %s24, 7
      %p85 = por %p83, %p84
      %p87 = scmp.ne.s32.totalorder %s70, %s86
      %p88 = scmp.eq.s32.totalorder %s24, 0
      %p89 = por %p87, %p88
      %s90 = ssub.s32 %s26, %s33
      %p91 = scmp.eq.s32.totalorder %s90, 0
      %s93 = sadd.s32 %s92, 1
      %s94 = scalar_select %p91, %s92, %s93
      %p97 = pneg %p91
      %p98 = scmp.eq.s32.totalorder %s18, 7
      %p99 = por %p97, %p98
      %p100 = scmp.ne.s32.totalorder %s92, %s95
      %p101 = scmp.eq.s32.totalorder %s18, 0
      %p102 = por %p100, %p101
      %p103 = scmp.ne.s32.totalorder %s92, %s95
      %p104 = scmp.eq.s32.totalorder %s23, 7
      %p105 = por %p103, %p104
      %p106 = scmp.ne.s32.totalorder %s95, %s96
      %p107 = scmp.eq.s32.totalorder %s23, 0
      %p108 = por %p106, %p107
      %p109 = scmp.ne.s32.totalorder %s95, %s96
      %p110 = scmp.eq.s32.totalorder %s24, 7
      %p111 = por %p109, %p110
      %p113 = scmp.ne.s32.totalorder %s96, %s112
      %p114 = scmp.eq.s32.totalorder %s24, 0
      %p115 = por %p113, %p114
      %s116 = ssub.s32 %s25, %s37
      %p117 = scmp.eq.s32.totalorder %s116, 0
      %s119 = sadd.s32 %s118, 1
      %s120 = scalar_select %p117, %s118, %s119
      %p123 = pneg %p117
      %p124 = scmp.eq.s32.totalorder %s18, 7
      %p125 = por %p123, %p124
      %p126 = scmp.ne.s32.totalorder %s118, %s121
      %p127 = scmp.eq.s32.totalorder %s18, 0
      %p128 = por %p126, %p127
      %p129 = scmp.ne.s32.totalorder %s118, %s121
      %p130 = scmp.eq.s32.totalorder %s23, 7
      %p131 = por %p129, %p130
      %p132 = scmp.ne.s32.totalorder %s121, %s122
      %p133 = scmp.eq.s32.totalorder %s23, 0
      %p134 = por %p132, %p133
      %p135 = scmp.ne.s32.totalorder %s121, %s122
      %p136 = scmp.eq.s32.totalorder %s24, 7
      %p137 = por %p135, %p136
      %p139 = scmp.ne.s32.totalorder %s122, %s138
      %p140 = scmp.eq.s32.totalorder %s24, 0
      %p141 = por %p139, %p140
      %p142 = scmp.le.s32.totalorder 1, %s18
      %p143 = scmp.lt.s32.totalorder %s18, 9
      %p144 = pnand %p142, %p143
      %p145 = pneg %p144
      // Predicated region
      $region9: #{tpu_custom_call.1} parent=5 // pred_check
        _
      $region10: #{tpu_custom_call.1} parent=5 // pred_check_branch
        %147 = sbr.rel (%p144) target = $region12
      $region11: #{tpu_custom_call.1} parent=5 // pred_region
        %s148 = ssub.s32 %s18, 1
      $region12: #{tpu_custom_call.1} parent=5 // pred_fallthru
        _
      %p149 = scmp.lt.s32.totalorder %s18, 8
      // Predicated region
      $region13: #{tpu_custom_call.1} parent=5 // pred_check
        %p150 = pneg %p149
      $region14: #{tpu_custom_call.1} parent=5 // pred_check_branch
        %152 = sbr.rel (%p150) target = $region16
      $region15: #{tpu_custom_call.1} parent=5 // pred_region
        // Predicated region
        $region17: #{tpu_custom_call.1} parent=15 // pred_check
          %p153 = pneg %p50
        $region18: #{tpu_custom_call.1} parent=15 // pred_check_branch
          %155 = sbr.rel (%p153) target = $region20
        $region19: #{tpu_custom_call.1} parent=15 // pred_region
          %s156 = sand.u32 %s40, 1
          %s157 = scalar_lea.sflag [#allocation4], %s156
          %s158 = sand.u32 %s40, 1
          %s159 = smul.addr %s158, 128
          %s160 = scalar_lea.vmem [#allocation3], %s159
          %s161 = smul.u32 16, %s25
          %s163 = ssub.s32 2048, 2048
          %164 = vsyncadd %s157, %s163
          %s165 = smul.addr %s161, 128
          %s166 = scalar_lea.hbm %s0, %s165
          %s167 = sshll.u32 %s160, 4
          %s168 = int_to_ptr.vmem [resolvable:$true] %s167
          %173 = dma.hbm_to_vmem [thread:$0]  %s166, 2048, %s168, %s157, 128, 128, 8
        $region20: #{tpu_custom_call.1} parent=15 // pred_fallthru
          _
        // Predicated region
        $region21: #{tpu_custom_call.1} parent=15 // pred_check
          %p174 = pneg %p76
        $region22: #{tpu_custom_call.1} parent=15 // pred_check_branch
          %176 = sbr.rel (%p174) target = $region24
        $region23: #{tpu_custom_call.1} parent=15 // pred_region
          %s177 = sand.u32 %s18, 1
          %s178 = scalar_lea.sflag [#allocation7], %s177
          %s179 = sand.u32 %s66, 1
          %s180 = smul.addr %s179, 256
          %s181 = scalar_lea.vmem [#allocation6], %s180
          %s182 = smul.u32 2, %s26
          %s184 = ssub.s32 4096, 4096
          %185 = vsyncadd %s178, %s184
          %s186 = smul.addr %s182, 128
          %s187 = scalar_lea.hbm %s1, %s186
          %s188 = sshll.u32 %s181, 4
          %s189 = int_to_ptr.vmem [resolvable:$true] %s188
          %194 = dma.hbm_to_vmem [thread:$0]  %s187, 4096, %s189, %s178, 1024, 256, 16
        $region24: #{tpu_custom_call.1} parent=15 // pred_fallthru
          _
        // Predicated region
        $region25: #{tpu_custom_call.1} parent=15 // pred_check
          %p195 = pneg %p102
        $region26: #{tpu_custom_call.1} parent=15 // pred_check_branch
          %197 = sbr.rel (%p195) target = $region28
        $region27: #{tpu_custom_call.1} parent=15 // pred_region
          %s198 = sand.u32 %s18, 1
          %s199 = scalar_lea.sflag [#allocation7], %s198
          %s200 = sand.u32 %s92, 1
          %s201 = smul.addr %s200, 128
          %s202 = scalar_lea.vmem [#allocation8], %s201
          %s203 = smul.u32 16, %s26
          %s205 = ssub.s32 2048, 2048
          %206 = vsyncadd %s199, %s205
          %s207 = smul.addr %s203, 128
          %s208 = scalar_lea.hbm %s2, %s207
          %s209 = sshll.u32 %s202, 4
          %s210 = int_to_ptr.vmem [resolvable:$true] %s209
          %215 = dma.hbm_to_vmem [thread:$0]  %s208, 2048, %s210, %s199, 128, 128, 8
        $region28: #{tpu_custom_call.1} parent=15 // pred_fallthru
          _
      $region16: #{tpu_custom_call.1} parent=5 // pred_fallthru
        _
      %p216 = scmp.le.s32.totalorder 1, %s18
      %p217 = scmp.lt.s32.totalorder %s18, 9
      %p218 = pnand %p216, %p217
      %p219 = pneg %p218
      // Predicated region
      $region29: #{tpu_custom_call.1} parent=5 // pred_check
        _
      $region30: #{tpu_custom_call.1} parent=5 // pred_check_branch
        %221 = sbr.rel (%p218) target = $region32
      $region31: #{tpu_custom_call.1} parent=5 // pred_region
        %s222 = ssub.s32 %s18, 1
        %s223 = sand.u32 %s43, 1
        %s224 = scalar_lea.sflag [#allocation4], %s223
        %s225 = sand.u32 %s43, 1
        %s226 = smul.addr %s225, 128
        %s227 = scalar_lea.vmem [#allocation3], %s226
        // Predicated region
        $region33: #{tpu_custom_call.1} parent=31 // pred_check
          %p228 = pneg %p56
        $region34: #{tpu_custom_call.1} parent=31 // pred_check_branch
          %230 = sbr.rel (%p228) target = $region36
        $region35: #{tpu_custom_call.1} parent=31 // pred_region
          %231 = dma.done %s224, 2048
        $region36: #{tpu_custom_call.1} parent=31 // pred_fallthru
          _
        %s232 = sand.u32 %s23, 1
        %s233 = scalar_lea.sflag [#allocation7], %s232
        %s234 = sand.u32 %s69, 1
        %s235 = smul.addr %s234, 256
        %s236 = scalar_lea.vmem [#allocation6], %s235
        // Predicated region
        $region37: #{tpu_custom_call.1} parent=31 // pred_check
          %p237 = pneg %p82
        $region38: #{tpu_custom_call.1} parent=31 // pred_check_branch
          %239 = sbr.rel (%p237) target = $region40
        $region39: #{tpu_custom_call.1} parent=31 // pred_region
          %240 = dma.done %s233, 4096
        $region40: #{tpu_custom_call.1} parent=31 // pred_fallthru
          _
        %s241 = sand.u32 %s23, 1
        %s242 = scalar_lea.sflag [#allocation7], %s241
        %s243 = sand.u32 %s95, 1
        %s244 = smul.addr %s243, 128
        %s245 = scalar_lea.vmem [#allocation8], %s244
        // Predicated region
        $region41: #{tpu_custom_call.1} parent=31 // pred_check
          %p246 = pneg %p108
        $region42: #{tpu_custom_call.1} parent=31 // pred_check_branch
          %248 = sbr.rel (%p246) target = $region44
        $region43: #{tpu_custom_call.1} parent=31 // pred_region
          %249 = dma.done %s242, 2048
        $region44: #{tpu_custom_call.1} parent=31 // pred_fallthru
          _
        %s250 = sand.u32 %s43, 1
        %s251 = scalar_lea.sflag [#allocation4], %s250
        %s252 = sand.u32 %s43, 1
        %s253 = smul.addr %s252, 128
        %s254 = scalar_lea.vmem [#allocation3], %s253
        %p255 = pneg %p56
        %p256 = pneg %p53
        %s257 = sand.u32 %s23, 1
        %s258 = scalar_lea.sflag [#allocation7], %s257
        %s259 = sand.u32 %s69, 1
        %s260 = smul.addr %s259, 256
        %s261 = scalar_lea.vmem [#allocation6], %s260
        %p262 = pneg %p82
        %p263 = pneg %p79
        %s264 = sand.u32 %s23, 1
        %s265 = scalar_lea.sflag [#allocation7], %s264
        %s266 = sand.u32 %s95, 1
        %s267 = smul.addr %s266, 128
        %s268 = scalar_lea.vmem [#allocation8], %s267
        %p269 = pneg %p108
        %p270 = pneg %p105
        %p271 = pneg %p134
        %p272 = pneg %p131
        %s273 = sand.u32 %s121, 1
        %s274 = scalar_lea.sflag [#allocation5], %s273
        %s275 = sand.u32 %s121, 1
        %s276 = smul.addr %s275, 128
        %s277 = scalar_lea.vmem [#allocation9], %s276
        %s278 = smul.u32 16, %s27
        %s279 = smul.u32 2, %s28
        %s280 = smul.u32 16, %s28
        %s281 = smul.u32 16, %s27
        %p282 = scmp.eq.s32.totalorder %s28, 0
        // Predicated region
        $region45: #{tpu_custom_call.1} parent=31 // pred_check
          %p283 = pneg %p282
        $region46: #{tpu_custom_call.1} parent=31 // pred_check_branch
          %285 = sbr.rel (%p283) target = $region48
        $region47: #{tpu_custom_call.1} parent=31 // pred_region
          %286 = vst [vmem:[#allocation2] sm:$0xff] 0.0
          %287 = vst [vmem:[#allocation2 + $0x8] sm:$0xff] 0.0
          %288 = vst [vmem:[#allocation2 + $0x10] sm:$0xff] 0.0
          %289 = vst [vmem:[#allocation2 + $0x18] sm:$0xff] 0.0
          %290 = vst [vmem:[#allocation2 + $0x20] sm:$0xff] 0.0
          %291 = vst [vmem:[#allocation2 + $0x28] sm:$0xff] 0.0
          %292 = vst [vmem:[#allocation2 + $0x30] sm:$0xff] 0.0
          %293 = vst [vmem:[#allocation2 + $0x38] sm:$0xff] 0.0
          %294 = vst [vmem:[#allocation2 + $0x40] sm:$0xff] 0.0
          %295 = vst [vmem:[#allocation2 + $0x48] sm:$0xff] 0.0
          %296 = vst [vmem:[#allocation2 + $0x50] sm:$0xff] 0.0
          %297 = vst [vmem:[#allocation2 + $0x58] sm:$0xff] 0.0
          %298 = vst [vmem:[#allocation2 + $0x60] sm:$0xff] 0.0
          %299 = vst [vmem:[#allocation2 + $0x68] sm:$0xff] 0.0
          %300 = vst [vmem:[#allocation2 + $0x70] sm:$0xff] 0.0
          %301 = vst [vmem:[#allocation2 + $0x78] sm:$0xff] 0.0
        $region48: #{tpu_custom_call.1} parent=31 // pred_fallthru
          _
        %v302 = vld [vmem:[%s227] sm:$0xff]
        %v303 = vld [vmem:[%s227 + $0x8] sm:$0xff]
        %v304 = vld [vmem:[%s227 + $0x10] sm:$0xff]
        %v305 = vld [vmem:[%s227 + $0x18] sm:$0xff]
        %v306 = vld [vmem:[%s227 + $0x20] sm:$0xff]
        %v307 = vld [vmem:[%s227 + $0x28] sm:$0xff]
        %v308 = vld [vmem:[%s227 + $0x30] sm:$0xff]
        %v309 = vld [vmem:[%s227 + $0x38] sm:$0xff]
        %v310 = vld [vmem:[%s227 + $0x40] sm:$0xff]
        %v311 = vld [vmem:[%s227 + $0x48] sm:$0xff]
        %v312 = vld [vmem:[%s227 + $0x50] sm:$0xff]
        %v313 = vld [vmem:[%s227 + $0x58] sm:$0xff]
        %v314 = vld [vmem:[%s227 + $0x60] sm:$0xff]
        %v315 = vld [vmem:[%s227 + $0x68] sm:$0xff]
        %v316 = vld [vmem:[%s227 + $0x70] sm:$0xff]
        %v317 = vld [vmem:[%s227 + $0x78] sm:$0xff]
        %v318 = vld [vmem:[%s236] sm:$0xff]
        %v319 = vld [vmem:[%s236 + $0x8] sm:$0xff]
        %v320 = vld [vmem:[%s236 + $0x10] sm:$0xff]
        %v321 = vld [vmem:[%s236 + $0x18] sm:$0xff]
        %v322 = vld [vmem:[%s236 + $0x20] sm:$0xff]
        %v323 = vld [vmem:[%s236 + $0x28] sm:$0xff]
        %v324 = vld [vmem:[%s236 + $0x30] sm:$0xff]
        %v325 = vld [vmem:[%s236 + $0x38] sm:$0xff]
        %v326 = vld [vmem:[%s236 + $0x40] sm:$0xff]
        %v327 = vld [vmem:[%s236 + $0x48] sm:$0xff]
        %v328 = vld [vmem:[%s236 + $0x50] sm:$0xff]
        %v329 = vld [vmem:[%s236 + $0x58] sm:$0xff]
        %v330 = vld [vmem:[%s236 + $0x60] sm:$0xff]
        %v331 = vld [vmem:[%s236 + $0x68] sm:$0xff]
        %v332 = vld [vmem:[%s236 + $0x70] sm:$0xff]
        %v333 = vld [vmem:[%s236 + $0x78] sm:$0xff]
        %v334 = vld [vmem:[%s236 + $0x80] sm:$0xff]
        %v335 = vld [vmem:[%s236 + $0x88] sm:$0xff]
        %v336 = vld [vmem:[%s236 + $0x90] sm:$0xff]
        %v337 = vld [vmem:[%s236 + $0x98] sm:$0xff]
        %v338 = vld [vmem:[%s236 + $0xa0] sm:$0xff]
        %v339 = vld [vmem:[%s236 + $0xa8] sm:$0xff]
        %v340 = vld [vmem:[%s236 + $0xb0] sm:$0xff]
        %v341 = vld [vmem:[%s236 + $0xb8] sm:$0xff]
        %v342 = vld [vmem:[%s236 + $0xc0] sm:$0xff]
        %v343 = vld [vmem:[%s236 + $0xc8] sm:$0xff]
        %v344 = vld [vmem:[%s236 + $0xd0] sm:$0xff]
        %v345 = vld [vmem:[%s236 + $0xd8] sm:$0xff]
        %v346 = vld [vmem:[%s236 + $0xe0] sm:$0xff]
        %v347 = vld [vmem:[%s236 + $0xe8] sm:$0xff]
        %v348 = vld [vmem:[%s236 + $0xf0] sm:$0xff]
        %v349 = vld [vmem:[%s236 + $0xf8] sm:$0xff]
        %350 = vmatprep.subr.mxu0 %v349
        %351 = vmatpush1.msra.mxu0 %v348
        %352 = vmatprep.subr.mxu0 %v347
        %353 = vmatpush1.msra.mxu0 %v346
        %354 = vmatprep.subr.mxu0 %v345
        %355 = vmatpush1.msra.mxu0 %v344
        %356 = vmatprep.subr.mxu0 %v343
        %357 = vmatpush1.msra.mxu0 %v342
        %358 = vmatprep.subr.mxu0 %v341
        %359 = vmatpush1.msra.mxu0 %v340
        %360 = vmatprep.subr.mxu0 %v339
        %361 = vmatpush1.msra.mxu0 %v338
        %362 = vmatprep.subr.mxu0 %v337
        %363 = vmatpush1.msra.mxu0 %v336
        %364 = vmatprep.subr.mxu0 %v335
        %365 = vmatpush1.msra.mxu0 %v334
        %366 = vmatprep.subr.mxu0 %v333
        %367 = vmatpush1.msra.mxu0 %v332
        %368 = vmatprep.subr.mxu0 %v331
        %369 = vmatpush1.msra.mxu0 %v330
        %370 = vmatprep.subr.mxu0 %v329
        %371 = vmatpush1.msra.mxu0 %v328
        %372 = vmatprep.subr.mxu0 %v327
        %373 = vmatpush1.msra.mxu0 %v326
        %374 = vmatprep.subr.mxu0 %v325
        %375 = vmatpush1.msra.mxu0 %v324
        %376 = vmatprep.subr.mxu0 %v323
        %377 = vmatpush1.msra.mxu0 %v322
        %378 = vmatprep.subr.mxu0 %v321
        %379 = vmatpush1.msra.mxu0 %v320
        %380 = vmatprep.subr.mxu0 %v319
        %381 = vmatpush1.msra.mxu0 %v318
        %382 = vmatprep.subr.mxu0 0.0
        %383 = vmatpush2.msra.mxu0 0.0
        %384 = vmatprep.subr.mxu0 0.0
        %385 = vmatpush2.msra.mxu0 0.0
        %386 = vmatprep.subr.mxu0 0.0
        %387 = vmatpush2.msra.mxu0 0.0
        %388 = vmatprep.subr.mxu0 0.0
        %389 = vmatpush2.msra.mxu0 0.0
        %390 = vmatprep.subr.mxu0 0.0
        %391 = vmatpush2.msra.mxu0 0.0
        %392 = vmatprep.subr.mxu0 0.0
        %393 = vmatpush2.msra.mxu0 0.0
        %394 = vmatprep.subr.mxu0 0.0
        %395 = vmatpush2.msra.mxu0 0.0
        %396 = vmatprep.subr.mxu0 0.0
        %397 = vmatpush2.msra.mxu0 0.0
        %398 = vmatprep.subr.mxu0 0.0
        %399 = vmatpush2.msra.mxu0 0.0
        %400 = vmatprep.subr.mxu0 0.0
        %401 = vmatpush2.msra.mxu0 0.0
        %402 = vmatprep.subr.mxu0 0.0
        %403 = vmatpush2.msra.mxu0 0.0
        %404 = vmatprep.subr.mxu0 0.0
        %405 = vmatpush2.msra.mxu0 0.0
        %406 = vmatprep.subr.mxu0 0.0
        %407 = vmatpush2.msra.mxu0 0.0
        %408 = vmatprep.subr.mxu0 0.0
        %409 = vmatpush2.msra.mxu0 0.0
        %410 = vmatprep.subr.mxu0 0.0
        %411 = vmatpush2.msra.mxu0 0.0
        %412 = vmatprep.subr.mxu0 0.0
        %413 = vmatpush2.msra.mxu0 0.0
        %414 = vmatprep.mubr.f32.mxu0 0.0
        %415 = vmatmul.mubr.f32.gmra.mxu0 %v302
        %v416 = vpop.f32.mrf.mxu0
        %v417 = vadd.f32 0.0, %v416
        %v418 = vpop.f32.mrf.mxu0
        %v419 = vadd.f32 0.0, %v418
        %420 = vmatprep.mubr.f32.mxu0 0.0
        %421 = vmatmul.mubr.f32.gmra.mxu0 %v303
        %v422 = vpop.f32.mrf.mxu0
        %v423 = vadd.f32 0.0, %v422
        %v424 = vpop.f32.mrf.mxu0
        %v425 = vadd.f32 0.0, %v424
        %426 = vmatprep.mubr.f32.mxu0 0.0
        %427 = vmatmul.mubr.f32.gmra.mxu0 %v304
        %v428 = vpop.f32.mrf.mxu0
        %v429 = vadd.f32 0.0, %v428
        %v430 = vpop.f32.mrf.mxu0
        %v431 = vadd.f32 0.0, %v430
        %432 = vmatprep.mubr.f32.mxu0 0.0
        %433 = vmatmul.mubr.f32.gmra.mxu0 %v305
        %v434 = vpop.f32.mrf.mxu0
        %v435 = vadd.f32 0.0, %v434
        %v436 = vpop.f32.mrf.mxu0
        %v437 = vadd.f32 0.0, %v436
        %438 = vmatprep.mubr.f32.mxu0 0.0
        %439 = vmatmul.mubr.f32.gmra.mxu0 %v306
        %v440 = vpop.f32.mrf.mxu0
        %v441 = vadd.f32 0.0, %v440
        %v442 = vpop.f32.mrf.mxu0
        %v443 = vadd.f32 0.0, %v442
        %444 = vmatprep.mubr.f32.mxu0 0.0
        %445 = vmatmul.mubr.f32.gmra.mxu0 %v307
        %v446 = vpop.f32.mrf.mxu0
        %v447 = vadd.f32 0.0, %v446
        %v448 = vpop.f32.mrf.mxu0
        %v449 = vadd.f32 0.0, %v448
        %450 = vmatprep.mubr.f32.mxu0 0.0
        %451 = vmatmul.mubr.f32.gmra.mxu0 %v308
        %v452 = vpop.f32.mrf.mxu0
        %v453 = vadd.f32 0.0, %v452
        %v454 = vpop.f32.mrf.mxu0
        %v455 = vadd.f32 0.0, %v454
        %456 = vmatprep.mubr.f32.mxu0 0.0
        %457 = vmatmul.mubr.f32.gmra.mxu0 %v309
        %v458 = vpop.f32.mrf.mxu0
        %v459 = vadd.f32 0.0, %v458
        %v460 = vpop.f32.mrf.mxu0
        %v461 = vadd.f32 0.0, %v460
        %462 = vmatprep.mubr.f32.mxu0 0.0
        %463 = vmatmul.mubr.f32.gmra.mxu0 %v310
        %v464 = vpop.f32.mrf.mxu0
        %v465 = vadd.f32 0.0, %v464
        %v466 = vpop.f32.mrf.mxu0
        %v467 = vadd.f32 0.0, %v466
        %468 = vmatprep.mubr.f32.mxu0 0.0
        %469 = vmatmul.mubr.f32.gmra.mxu0 %v311
        %v470 = vpop.f32.mrf.mxu0
        %v471 = vadd.f32 0.0, %v470
        %v472 = vpop.f32.mrf.mxu0
        %v473 = vadd.f32 0.0, %v472
        %474 = vmatprep.mubr.f32.mxu0 0.0
        %475 = vmatmul.mubr.f32.gmra.mxu0 %v312
        %v476 = vpop.f32.mrf.mxu0
        %v477 = vadd.f32 0.0, %v476
        %v478 = vpop.f32.mrf.mxu0
        %v479 = vadd.f32 0.0, %v478
        %480 = vmatprep.mubr.f32.mxu0 0.0
        %481 = vmatmul.mubr.f32.gmra.mxu0 %v313
        %v482 = vpop.f32.mrf.mxu0
        %v483 = vadd.f32 0.0, %v482
        %v484 = vpop.f32.mrf.mxu0
        %v485 = vadd.f32 0.0, %v484
        %486 = vmatprep.mubr.f32.mxu0 0.0
        %487 = vmatmul.mubr.f32.gmra.mxu0 %v314
        %v488 = vpop.f32.mrf.mxu0
        %v489 = vadd.f32 0.0, %v488
        %v490 = vpop.f32.mrf.mxu0
        %v491 = vadd.f32 0.0, %v490
        %492 = vmatprep.mubr.f32.mxu0 0.0
        %493 = vmatmul.mubr.f32.gmra.mxu0 %v315
        %v494 = vpop.f32.mrf.mxu0
        %v495 = vadd.f32 0.0, %v494
        %v496 = vpop.f32.mrf.mxu0
        %v497 = vadd.f32 0.0, %v496
        %498 = vmatprep.mubr.f32.mxu0 0.0
        %499 = vmatmul.mubr.f32.gmra.mxu0 %v316
        %v500 = vpop.f32.mrf.mxu0
        %v501 = vadd.f32 0.0, %v500
        %v502 = vpop.f32.mrf.mxu0
        %v503 = vadd.f32 0.0, %v502
        %504 = vmatprep.mubr.f32.mxu0 0.0
        %505 = vmatmul.mubr.f32.gmra.mxu0 %v317
        %v506 = vpop.f32.mrf.mxu0
        %v507 = vadd.f32 0.0, %v506
        %v508 = vpop.f32.mrf.mxu0
        %v509 = vadd.f32 0.0, %v508
        %510 = vdwg.mxu0
        %v511 = vxor.u32 %v417, 2147483648
        %v512 = vxor.u32 %v423, 2147483648
        %v513 = vxor.u32 %v429, 2147483648
        %v514 = vxor.u32 %v435, 2147483648
        %v515 = vxor.u32 %v441, 2147483648
        %v516 = vxor.u32 %v447, 2147483648
        %v517 = vxor.u32 %v453, 2147483648
        %v518 = vxor.u32 %v459, 2147483648
        %v519 = vxor.u32 %v465, 2147483648
        %v520 = vxor.u32 %v471, 2147483648
        %v521 = vxor.u32 %v477, 2147483648
        %v522 = vxor.u32 %v483, 2147483648
        %v523 = vxor.u32 %v489, 2147483648
        %v524 = vxor.u32 %v495, 2147483648
        %v525 = vxor.u32 %v501, 2147483648
        %v526 = vxor.u32 %v507, 2147483648
        %v527 = vmul.f32 %v511, 1.442695
        %v528 = vpow.pop %v527
        %v529 = vmul.f32 %v512, 1.442695
        %v530 = vpow.pop %v529
        %v531 = vmul.f32 %v513, 1.442695
        %v532 = vpow.pop %v531
        %v533 = vmul.f32 %v514, 1.442695
        %v534 = vpow.pop %v533
        %v535 = vmul.f32 %v515, 1.442695
        %v536 = vpow.pop %v535
        %v537 = vmul.f32 %v516, 1.442695
        %v538 = vpow.pop %v537
        %v539 = vmul.f32 %v517, 1.442695
        %v540 = vpow.pop %v539
        %v541 = vmul.f32 %v518, 1.442695
        %v542 = vpow.pop %v541
        %v543 = vmul.f32 %v519, 1.442695
        %v544 = vpow.pop %v543
        %v545 = vmul.f32 %v520, 1.442695
        %v546 = vpow.pop %v545
        %v547 = vmul.f32 %v521, 1.442695
        %v548 = vpow.pop %v547
        %v549 = vmul.f32 %v522, 1.442695
        %v550 = vpow.pop %v549
        %v551 = vmul.f32 %v523, 1.442695
        %v552 = vpow.pop %v551
        %v553 = vmul.f32 %v524, 1.442695
        %v554 = vpow.pop %v553
        %v555 = vmul.f32 %v525, 1.442695
        %v556 = vpow.pop %v555
        %v557 = vmul.f32 %v526, 1.442695
        %v558 = vpow.pop %v557
        %v559 = vadd.f32 %v528, 1.0
        %v560 = vadd.f32 %v530, 1.0
        %v561 = vadd.f32 %v532, 1.0
        %v562 = vadd.f32 %v534, 1.0
        %v563 = vadd.f32 %v536, 1.0
        %v564 = vadd.f32 %v538, 1.0
        %v565 = vadd.f32 %v540, 1.0
        %v566 = vadd.f32 %v542, 1.0
        %v567 = vadd.f32 %v544, 1.0
        %v568 = vadd.f32 %v546, 1.0
        %v569 = vadd.f32 %v548, 1.0
        %v570 = vadd.f32 %v550, 1.0
        %v571 = vadd.f32 %v552, 1.0
        %v572 = vadd.f32 %v554, 1.0
        %v573 = vadd.f32 %v556, 1.0
        %v574 = vadd.f32 %v558, 1.0
        %v575 = vrcp.pop %v559
        %v576 = vmul.f32 1.0, %v575
        %v577 = vrcp.pop %v560
        %v578 = vmul.f32 1.0, %v577
        %v579 = vrcp.pop %v561
        %v580 = vmul.f32 1.0, %v579
        %v581 = vrcp.pop %v562
        %v582 = vmul.f32 1.0, %v581
        %v583 = vrcp.pop %v563
        %v584 = vmul.f32 1.0, %v583
        %v585 = vrcp.pop %v564
        %v586 = vmul.f32 1.0, %v585
        %v587 = vrcp.pop %v565
        %v588 = vmul.f32 1.0, %v587
        %v589 = vrcp.pop %v566
        %v590 = vmul.f32 1.0, %v589
        %v591 = vrcp.pop %v567
        %v592 = vmul.f32 1.0, %v591
        %v593 = vrcp.pop %v568
        %v594 = vmul.f32 1.0, %v593
        %v595 = vrcp.pop %v569
        %v596 = vmul.f32 1.0, %v595
        %v597 = vrcp.pop %v570
        %v598 = vmul.f32 1.0, %v597
        %v599 = vrcp.pop %v571
        %v600 = vmul.f32 1.0, %v599
        %v601 = vrcp.pop %v572
        %v602 = vmul.f32 1.0, %v601
        %v603 = vrcp.pop %v573
        %v604 = vmul.f32 1.0, %v603
        %v605 = vrcp.pop %v574
        %v606 = vmul.f32 1.0, %v605
        %v607 = vmul.f32 %v417, %v576
        %v608 = vmul.f32 %v423, %v578
        %v609 = vmul.f32 %v429, %v580
        %v610 = vmul.f32 %v435, %v582
        %v611 = vmul.f32 %v441, %v584
        %v612 = vmul.f32 %v447, %v586
        %v613 = vmul.f32 %v453, %v588
        %v614 = vmul.f32 %v459, %v590
        %v615 = vmul.f32 %v465, %v592
        %v616 = vmul.f32 %v471, %v594
        %v617 = vmul.f32 %v477, %v596
        %v618 = vmul.f32 %v483, %v598
        %v619 = vmul.f32 %v489, %v600
        %v620 = vmul.f32 %v495, %v602
        %v621 = vmul.f32 %v501, %v604
        %v622 = vmul.f32 %v507, %v606
        %v623 = vmul.f32 %v607, %v419
        %v624 = vmul.f32 %v608, %v425
        %v625 = vmul.f32 %v609, %v431
        %v626 = vmul.f32 %v610, %v437
        %v627 = vmul.f32 %v611, %v443
        %v628 = vmul.f32 %v612, %v449
        %v629 = vmul.f32 %v613, %v455
        %v630 = vmul.f32 %v614, %v461
        %v631 = vmul.f32 %v615, %v467
        %v632 = vmul.f32 %v616, %v473
        %v633 = vmul.f32 %v617, %v479
        %v634 = vmul.f32 %v618, %v485
        %v635 = vmul.f32 %v619, %v491
        %v636 = vmul.f32 %v620, %v497
        %v637 = vmul.f32 %v621, %v503
        %v638 = vmul.f32 %v622, %v509
        %v639 = vld [vmem:[#allocation2] sm:$0xff]
        %v640 = vld [vmem:[#allocation2 + $0x8] sm:$0xff]
        %v641 = vld [vmem:[#allocation2 + $0x10] sm:$0xff]
        %v642 = vld [vmem:[#allocation2 + $0x18] sm:$0xff]
        %v643 = vld [vmem:[#allocation2 + $0x20] sm:$0xff]
        %v644 = vld [vmem:[#allocation2 + $0x28] sm:$0xff]
        %v645 = vld [vmem:[#allocation2 + $0x30] sm:$0xff]
        %v646 = vld [vmem:[#allocation2 + $0x38] sm:$0xff]
        %v647 = vld [vmem:[#allocation2 + $0x40] sm:$0xff]
        %v648 = vld [vmem:[#allocation2 + $0x48] sm:$0xff]
        %v649 = vld [vmem:[#allocation2 + $0x50] sm:$0xff]
        %v650 = vld [vmem:[#allocation2 + $0x58] sm:$0xff]
        %v651 = vld [vmem:[#allocation2 + $0x60] sm:$0xff]
        %v652 = vld [vmem:[#allocation2 + $0x68] sm:$0xff]
        %v653 = vld [vmem:[#allocation2 + $0x70] sm:$0xff]
        %v654 = vld [vmem:[#allocation2 + $0x78] sm:$0xff]
        %v655 = vld [vmem:[%s245] sm:$0xff]
        %v656 = vld [vmem:[%s245 + $0x8] sm:$0xff]
        %v657 = vld [vmem:[%s245 + $0x10] sm:$0xff]
        %v658 = vld [vmem:[%s245 + $0x18] sm:$0xff]
        %v659 = vld [vmem:[%s245 + $0x20] sm:$0xff]
        %v660 = vld [vmem:[%s245 + $0x28] sm:$0xff]
        %v661 = vld [vmem:[%s245 + $0x30] sm:$0xff]
        %v662 = vld [vmem:[%s245 + $0x38] sm:$0xff]
        %v663 = vld [vmem:[%s245 + $0x40] sm:$0xff]
        %v664 = vld [vmem:[%s245 + $0x48] sm:$0xff]
        %v665 = vld [vmem:[%s245 + $0x50] sm:$0xff]
        %v666 = vld [vmem:[%s245 + $0x58] sm:$0xff]
        %v667 = vld [vmem:[%s245 + $0x60] sm:$0xff]
        %v668 = vld [vmem:[%s245 + $0x68] sm:$0xff]
        %v669 = vld [vmem:[%s245 + $0x70] sm:$0xff]
        %v670 = vld [vmem:[%s245 + $0x78] sm:$0xff]
        %671 = vmatprep.subr.mxu0 0.0
        %672 = vmatpush1.msra.mxu0 %v670
        %673 = vmatprep.subr.mxu0 0.0
        %674 = vmatpush1.msra.mxu0 %v669
        %675 = vmatprep.subr.mxu0 0.0
        %676 = vmatpush1.msra.mxu0 %v668
        %677 = vmatprep.subr.mxu0 0.0
        %678 = vmatpush1.msra.mxu0 %v667
        %679 = vmatprep.subr.mxu0 0.0
        %680 = vmatpush1.msra.mxu0 %v666
        %681 = vmatprep.subr.mxu0 0.0
        %682 = vmatpush1.msra.mxu0 %v665
        %683 = vmatprep.subr.mxu0 0.0
        %684 = vmatpush1.msra.mxu0 %v664
        %685 = vmatprep.subr.mxu0 0.0
        %686 = vmatpush1.msra.mxu0 %v663
        %687 = vmatprep.subr.mxu0 0.0
        %688 = vmatpush1.msra.mxu0 %v662
        %689 = vmatprep.subr.mxu0 0.0
        %690 = vmatpush1.msra.mxu0 %v661
        %691 = vmatprep.subr.mxu0 0.0
        %692 = vmatpush1.msra.mxu0 %v660
        %693 = vmatprep.subr.mxu0 0.0
        %694 = vmatpush1.msra.mxu0 %v659
        %695 = vmatprep.subr.mxu0 0.0
        %696 = vmatpush1.msra.mxu0 %v658
        %697 = vmatprep.subr.mxu0 0.0
        %698 = vmatpush1.msra.mxu0 %v657
        %699 = vmatprep.subr.mxu0 0.0
        %700 = vmatpush1.msra.mxu0 %v656
        %701 = vmatprep.subr.mxu0 0.0
        %702 = vmatpush1.msra.mxu0 %v655
        %703 = vmatprep.subr.mxu0 0.0
        %704 = vmatpush2.msra.mxu0 0.0
        %705 = vmatprep.subr.mxu0 0.0
        %706 = vmatpush2.msra.mxu0 0.0
        %707 = vmatprep.subr.mxu0 0.0
        %708 = vmatpush2.msra.mxu0 0.0
        %709 = vmatprep.subr.mxu0 0.0
        %710 = vmatpush2.msra.mxu0 0.0
        %711 = vmatprep.subr.mxu0 0.0
        %712 = vmatpush2.msra.mxu0 0.0
        %713 = vmatprep.subr.mxu0 0.0
        %714 = vmatpush2.msra.mxu0 0.0
        %715 = vmatprep.subr.mxu0 0.0
        %716 = vmatpush2.msra.mxu0 0.0
        %717 = vmatprep.subr.mxu0 0.0
        %718 = vmatpush2.msra.mxu0 0.0
        %719 = vmatprep.subr.mxu0 0.0
        %720 = vmatpush2.msra.mxu0 0.0
        %721 = vmatprep.subr.mxu0 0.0
        %722 = vmatpush2.msra.mxu0 0.0
        %723 = vmatprep.subr.mxu0 0.0
        %724 = vmatpush2.msra.mxu0 0.0
        %725 = vmatprep.subr.mxu0 0.0
        %726 = vmatpush2.msra.mxu0 0.0
        %727 = vmatprep.subr.mxu0 0.0
        %728 = vmatpush2.msra.mxu0 0.0
        %729 = vmatprep.subr.mxu0 0.0
        %730 = vmatpush2.msra.mxu0 0.0
        %731 = vmatprep.subr.mxu0 0.0
        %732 = vmatpush2.msra.mxu0 0.0
        %733 = vmatprep.subr.mxu0 0.0
        %734 = vmatpush2.msra.mxu0 0.0
        %735 = vmatprep.mubr.f32.mxu0 0.0
        %736 = vmatmul.mubr.f32.gmra.mxu0 %v623
        %v737 = vpop.f32.mrf.mxu0
        %v738 = vadd.f32 0.0, %v737
        %v739 = vpop.f32.mrf.mxu0
        %740 = vmatprep.mubr.f32.mxu0 0.0
        %741 = vmatmul.mubr.f32.gmra.mxu0 %v624
        %v742 = vpop.f32.mrf.mxu0
        %v743 = vadd.f32 0.0, %v742
        %v744 = vpop.f32.mrf.mxu0
        %745 = vmatprep.mubr.f32.mxu0 0.0
        %746 = vmatmul.mubr.f32.gmra.mxu0 %v625
        %v747 = vpop.f32.mrf.mxu0
        %v748 = vadd.f32 0.0, %v747
        %v749 = vpop.f32.mrf.mxu0
        %750 = vmatprep.mubr.f32.mxu0 0.0
        %751 = vmatmul.mubr.f32.gmra.mxu0 %v626
        %v752 = vpop.f32.mrf.mxu0
        %v753 = vadd.f32 0.0, %v752
        %v754 = vpop.f32.mrf.mxu0
        %755 = vmatprep.mubr.f32.mxu0 0.0
        %756 = vmatmul.mubr.f32.gmra.mxu0 %v627
        %v757 = vpop.f32.mrf.mxu0
        %v758 = vadd.f32 0.0, %v757
        %v759 = vpop.f32.mrf.mxu0
        %760 = vmatprep.mubr.f32.mxu0 0.0
        %761 = vmatmul.mubr.f32.gmra.mxu0 %v628
        %v762 = vpop.f32.mrf.mxu0
        %v763 = vadd.f32 0.0, %v762
        %v764 = vpop.f32.mrf.mxu0
        %765 = vmatprep.mubr.f32.mxu0 0.0
        %766 = vmatmul.mubr.f32.gmra.mxu0 %v629
        %v767 = vpop.f32.mrf.mxu0
        %v768 = vadd.f32 0.0, %v767
        %v769 = vpop.f32.mrf.mxu0
        %770 = vmatprep.mubr.f32.mxu0 0.0
        %771 = vmatmul.mubr.f32.gmra.mxu0 %v630
        %v772 = vpop.f32.mrf.mxu0
        %v773 = vadd.f32 0.0, %v772
        %v774 = vpop.f32.mrf.mxu0
        %775 = vmatprep.mubr.f32.mxu0 0.0
        %776 = vmatmul.mubr.f32.gmra.mxu0 %v631
        %v777 = vpop.f32.mrf.mxu0
        %v778 = vadd.f32 0.0, %v777
        %v779 = vpop.f32.mrf.mxu0
        %780 = vmatprep.mubr.f32.mxu0 0.0
        %781 = vmatmul.mubr.f32.gmra.mxu0 %v632
        %v782 = vpop.f32.mrf.mxu0
        %v783 = vadd.f32 0.0, %v782
        %v784 = vpop.f32.mrf.mxu0
        %785 = vmatprep.mubr.f32.mxu0 0.0
        %786 = vmatmul.mubr.f32.gmra.mxu0 %v633
        %v787 = vpop.f32.mrf.mxu0
        %v788 = vadd.f32 0.0, %v787
        %v789 = vpop.f32.mrf.mxu0
        %790 = vmatprep.mubr.f32.mxu0 0.0
        %791 = vmatmul.mubr.f32.gmra.mxu0 %v634
        %v792 = vpop.f32.mrf.mxu0
        %v793 = vadd.f32 0.0, %v792
        %v794 = vpop.f32.mrf.mxu0
        %795 = vmatprep.mubr.f32.mxu0 0.0
        %796 = vmatmul.mubr.f32.gmra.mxu0 %v635
        %v797 = vpop.f32.mrf.mxu0
        %v798 = vadd.f32 0.0, %v797
        %v799 = vpop.f32.mrf.mxu0
        %800 = vmatprep.mubr.f32.mxu0 0.0
        %801 = vmatmul.mubr.f32.gmra.mxu0 %v636
        %v802 = vpop.f32.mrf.mxu0
        %v803 = vadd.f32 0.0, %v802
        %v804 = vpop.f32.mrf.mxu0
        %805 = vmatprep.mubr.f32.mxu0 0.0
        %806 = vmatmul.mubr.f32.gmra.mxu0 %v637
        %v807 = vpop.f32.mrf.mxu0
        %v808 = vadd.f32 0.0, %v807
        %v809 = vpop.f32.mrf.mxu0
        %810 = vmatprep.mubr.f32.mxu0 0.0
        %811 = vmatmul.mubr.f32.gmra.mxu0 %v638
        %v812 = vpop.f32.mrf.mxu0
        %v813 = vadd.f32 0.0, %v812
        %v814 = vpop.f32.mrf.mxu0
        %815 = vdwg.mxu0
        %v816 = vadd.f32 %v639, %v738
        %v817 = vadd.f32 %v640, %v743
        %v818 = vadd.f32 %v641, %v748
        %v819 = vadd.f32 %v642, %v753
        %v820 = vadd.f32 %v643, %v758
        %v821 = vadd.f32 %v644, %v763
        %v822 = vadd.f32 %v645, %v768
        %v823 = vadd.f32 %v646, %v773
        %v824 = vadd.f32 %v647, %v778
        %v825 = vadd.f32 %v648, %v783
        %v826 = vadd.f32 %v649, %v788
        %v827 = vadd.f32 %v650, %v793
        %v828 = vadd.f32 %v651, %v798
        %v829 = vadd.f32 %v652, %v803
        %v830 = vadd.f32 %v653, %v808
        %v831 = vadd.f32 %v654, %v813
        %832 = vst [vmem:[#allocation2] sm:$0xff] %v816
        %833 = vst [vmem:[#allocation2 + $0x8] sm:$0xff] %v817
        %834 = vst [vmem:[#allocation2 + $0x10] sm:$0xff] %v818
        %835 = vst [vmem:[#allocation2 + $0x18] sm:$0xff] %v819
        %836 = vst [vmem:[#allocation2 + $0x20] sm:$0xff] %v820
        %837 = vst [vmem:[#allocation2 + $0x28] sm:$0xff] %v821
        %838 = vst [vmem:[#allocation2 + $0x30] sm:$0xff] %v822
        %839 = vst [vmem:[#allocation2 + $0x38] sm:$0xff] %v823
        %840 = vst [vmem:[#allocation2 + $0x40] sm:$0xff] %v824
        %841 = vst [vmem:[#allocation2 + $0x48] sm:$0xff] %v825
        %842 = vst [vmem:[#allocation2 + $0x50] sm:$0xff] %v826
        %843 = vst [vmem:[#allocation2 + $0x58] sm:$0xff] %v827
        %844 = vst [vmem:[#allocation2 + $0x60] sm:$0xff] %v828
        %845 = vst [vmem:[#allocation2 + $0x68] sm:$0xff] %v829
        %846 = vst [vmem:[#allocation2 + $0x70] sm:$0xff] %v830
        %847 = vst [vmem:[#allocation2 + $0x78] sm:$0xff] %v831
        %p848 = scmp.eq.s32.totalorder %s28, 3
        // Predicated region
        $region49: #{tpu_custom_call.1} parent=31 // pred_check
          %p849 = pneg %p848
        $region50: #{tpu_custom_call.1} parent=31 // pred_check_branch
          %851 = sbr.rel (%p849) target = $region52
        $region51: #{tpu_custom_call.1} parent=31 // pred_region
          %v852 = vld [vmem:[#allocation2] sm:$0xff]
          %v853 = vld [vmem:[#allocation2 + $0x8] sm:$0xff]
          %v854 = vld [vmem:[#allocation2 + $0x10] sm:$0xff]
          %v855 = vld [vmem:[#allocation2 + $0x18] sm:$0xff]
          %v856 = vld [vmem:[#allocation2 + $0x20] sm:$0xff]
          %v857 = vld [vmem:[#allocation2 + $0x28] sm:$0xff]
          %v858 = vld [vmem:[#allocation2 + $0x30] sm:$0xff]
          %v859 = vld [vmem:[#allocation2 + $0x38] sm:$0xff]
          %v860 = vld [vmem:[#allocation2 + $0x40] sm:$0xff]
          %v861 = vld [vmem:[#allocation2 + $0x48] sm:$0xff]
          %v862 = vld [vmem:[#allocation2 + $0x50] sm:$0xff]
          %v863 = vld [vmem:[#allocation2 + $0x58] sm:$0xff]
          %v864 = vld [vmem:[#allocation2 + $0x60] sm:$0xff]
          %v865 = vld [vmem:[#allocation2 + $0x68] sm:$0xff]
          %v866 = vld [vmem:[#allocation2 + $0x70] sm:$0xff]
          %v867 = vld [vmem:[#allocation2 + $0x78] sm:$0xff]
          %868 = vst [vmem:[%s277] sm:$0xff] %v852
          %869 = vst [vmem:[%s277 + $0x8] sm:$0xff] %v853
          %870 = vst [vmem:[%s277 + $0x10] sm:$0xff] %v854
          %871 = vst [vmem:[%s277 + $0x18] sm:$0xff] %v855
          %872 = vst [vmem:[%s277 + $0x20] sm:$0xff] %v856
          %873 = vst [vmem:[%s277 + $0x28] sm:$0xff] %v857
          %874 = vst [vmem:[%s277 + $0x30] sm:$0xff] %v858
          %875 = vst [vmem:[%s277 + $0x38] sm:$0xff] %v859
          %876 = vst [vmem:[%s277 + $0x40] sm:$0xff] %v860
          %877 = vst [vmem:[%s277 + $0x48] sm:$0xff] %v861
          %878 = vst [vmem:[%s277 + $0x50] sm:$0xff] %v862
          %879 = vst [vmem:[%s277 + $0x58] sm:$0xff] %v863
          %880 = vst [vmem:[%s277 + $0x60] sm:$0xff] %v864
          %881 = vst [vmem:[%s277 + $0x68] sm:$0xff] %v865
          %882 = vst [vmem:[%s277 + $0x70] sm:$0xff] %v866
          %883 = vst [vmem:[%s277 + $0x78] sm:$0xff] %v867
        $region52: #{tpu_custom_call.1} parent=31 // pred_fallthru
          _
        %s884 = sand.u32 %s121, 1
        %s885 = scalar_lea.sflag [#allocation5], %s884
        %s886 = sand.u32 %s121, 1
        %s887 = smul.addr %s886, 128
        %s888 = scalar_lea.vmem [#allocation9], %s887
        // Predicated region
        $region53: #{tpu_custom_call.1} parent=31 // pred_check
          %p889 = pneg %p131
        $region54: #{tpu_custom_call.1} parent=31 // pred_check_branch
          %891 = sbr.rel (%p889) target = $region56
        $region55: #{tpu_custom_call.1} parent=31 // pred_region
          %s892 = smul.u32 16, %s27
          %s894 = ssub.s32 2048, 2048
          %895 = vsyncadd %s885, %s894
          %s896 = smul.addr %s892, 128
          %s897 = scalar_lea.hbm %s3, %s896
          %s898 = sshll.u32 %s888, 4
          %s899 = int_to_ptr.vmem [resolvable:$true] %s898
          %904 = dma.vmem_to_hbm [thread:$0]  %s899, 2048, %s897, %s885, 128, 128, 8
        $region56: #{tpu_custom_call.1} parent=31 // pred_fallthru
          _
      $region32: #{tpu_custom_call.1} parent=5 // pred_fallthru
        _
      %p905 = scmp.le.s32.totalorder 2, %s18
      // Predicated region
      $region57: #{tpu_custom_call.1} parent=5 // pred_check
        %p906 = pneg %p905
      $region58: #{tpu_custom_call.1} parent=5 // pred_check_branch
        %908 = sbr.rel (%p906) target = $region60
      $region59: #{tpu_custom_call.1} parent=5 // pred_region
        %s909 = ssub.s32 %s18, 2
        // Predicated region
        $region61: #{tpu_custom_call.1} parent=59 // pred_check
          %p910 = pneg %p137
        $region62: #{tpu_custom_call.1} parent=59 // pred_check_branch
          %912 = sbr.rel (%p910) target = $region64
        $region63: #{tpu_custom_call.1} parent=59 // pred_region
          %s913 = sand.u32 %s122, 1
          %s914 = scalar_lea.sflag [#allocation5], %s913
          %s915 = sand.u32 %s122, 1
          %s916 = smul.addr %s915, 128
          %s917 = scalar_lea.vmem [#allocation9], %s916
          %918 = dma.done %s914, 2048
        $region64: #{tpu_custom_call.1} parent=59 // pred_fallthru
          _
      $region60: #{tpu_custom_call.1} parent=5 // pred_fallthru
        _
    $region6: #{tpu_custom_call.1} parent=1 // loop_footer
      %s22 = sadd.s32 1, %s18
    $region7: #{tpu_custom_call.1} parent=1 // loop_footer_branch
      %17 = sbr.rel target = $region3
    $region8: #{tpu_custom_call.1} parent=1 // loop_exit
      _
    %919 = vsyncpa [#allocation4], 1
    %s920 = scalar_lea.sflag [#allocation4], 1
    %921 = vsyncpa %s920, 1
    %922 = vsyncpa [#allocation7], 1
    %s923 = scalar_lea.sflag [#allocation7], 1
    %924 = vsyncpa %s923, 1
    %925 = vsyncpa [#allocation5], 1
    %s926 = scalar_lea.sflag [#allocation5], 1
    %927 = vsyncpa %s926, 1

</llo_original>
